<compile_context>
chip_gen: v6e
topology: v6e:2x2x1
jax: 0.10.0
libtpu: 0.0.40
codegen_flags: <defaults>
</compile_context>

<pallas_src>
import jax
import jax.numpy as jnp
from jax.experimental import pallas as pl
from jax.experimental.pallas import tpu as pltpu


def mlp_kernel(w1_ref, b1_ref, w2_ref, b2_ref, x_ref, out_ref):
    # w1_ref: SMEM (2, 3), b1_ref: SMEM (2,), w2_ref: SMEM (1, 2), b2_ref: SMEM (1,)
    # x_ref : VMEM (3, ROWS, 128) -- 3 feature planes, batch dense over (sublane, lane)
    # out   : VMEM (ROWS, 128)
    x0 = x_ref[0]  # (ROWS, 128) full-vreg slabs
    x1 = x_ref[1]
    x2 = x_ref[2]

    # hidden = relu(W1 @ x + b1), per hidden unit, scalar-broadcast FMAs on the VPU
    h0 = jnp.maximum(
        w1_ref[0, 0] * x0 + w1_ref[0, 1] * x1 + w1_ref[0, 2] * x2 + b1_ref[0], 0.0
    )
    h1 = jnp.maximum(
        w1_ref[1, 0] * x0 + w1_ref[1, 1] * x1 + w1_ref[1, 2] * x2 + b1_ref[1], 0.0
    )

    # output = W2 @ h + b2
    y = w2_ref[0, 0] * h0 + w2_ref[0, 1] * h1 + b2_ref[0]
    out_ref[...] = y.astype(out_ref.dtype)


def _round_up(a, b):
    return ((a + b - 1) // b) * b


def mlp_forward_blocks(xb, w1, b1, w2, b2, *, rows_max=2048):
    """xb: (3, NB, 128) float32 -- feature-major, batch packed as (NB, 128).
    Returns (NB, 128) float32 (one output feature per batch element)."""
    _, nb, _ = xb.shape

    # ROWS: multiple of 8 (or == NB), targeting ~4 MiB HBM traffic per grid step
    # and >= ~8 grid steps so the two v7x TensorCores stay load-balanced.
    if nb <= 8:
        rows = nb  # single block equal to the full array dim (always legal)
    else:
        rows = min(rows_max, _round_up(pl.cdiv(nb, 8), 8))

    grid = (pl.cdiv(nb, rows),)
    n_elems = nb * 128
    smem = pl.BlockSpec(memory_space=pltpu.MemorySpace.SMEM)

    return pl.pallas_call(
        mlp_kernel,
        out_shape=jax.ShapeDtypeStruct((nb, 128), jnp.float32),
        grid=grid,
        in_specs=[
            smem,  # w1 (2, 3)  -- DMA'd once, resident across the grid
            smem,  # b1 (2,)
            smem,  # w2 (1, 2)
            smem,  # b2 (1,)
            pl.BlockSpec((3, rows, 128), lambda i: (0, i, 0)),
        ],
        out_specs=pl.BlockSpec((rows, 128), lambda i: (i, 0)),
        compiler_params=pltpu.CompilerParams(
            dimension_semantics=("parallel",),
            # double-buffered peak is ~8 MiB at rows_max=2048; 32 MiB is safe on
            # v5e/v6e (128 MiB physical) and v7x (64 MiB physical).
            vmem_limit_bytes=32 * 1024 * 1024,
        ),
        cost_estimate=pl.CostEstimate(
            flops=18 * n_elems,           # 6 mul + ~12 add/max per element
            transcendentals=0,
            bytes_accessed=16 * n_elems,  # 12 B in + 4 B out per element
        ),
    )(w1, b1, w2, b2, xb)


def mlp_forward(x, w1, b1, w2, b2, *, rows_max=2048):
    """x: (N, 3) float32 (PyTorch layout). Returns (N, 1) float32.

    NOTE: the (N,3)->(3,N) relayout below is an extra full HBM pass that costs
    more than the kernel's own traffic; producers that can hand over the
    (3, NB, 128) layout should call mlp_forward_blocks directly."""
    n = x.shape[0]
    xt = jnp.transpose(x)  # (3, N)

    nb = pl.cdiv(n, 128)
    n128 = nb * 128
    if n128 != n:
        # lane-granularity pad only (<= 127 elements), required for the (NB,128)
        # reshape; tail lanes produce garbage that is sliced off below.
        xt = jnp.pad(xt, ((0, 0), (0, n128 - n)))
    xb = xt.reshape(3, nb, 128)

    out_b = mlp_forward_blocks(xb, w1, b1, w2, b2, rows_max=rows_max)  # (nb, 128)
    return out_b.reshape(-1)[:n].reshape(n, 1)


def init_params(key):
    # PyTorch-like uniform(-1/sqrt(fan_in), 1/sqrt(fan_in)) init.
    k1, k2, k3, k4 = jax.random.split(key, 4)
    bound1 = 1.0 / jnp.sqrt(3.0)
    bound2 = 1.0 / jnp.sqrt(2.0)
    w1 = jax.random.uniform(k1, (2, 3), jnp.float32, -bound1, bound1)
    b1 = jax.random.uniform(k2, (2,), jnp.float32, -bound1, bound1)
    w2 = jax.random.uniform(k3, (1, 2), jnp.float32, -bound2, bound2)
    b2 = jax.random.uniform(k4, (1,), jnp.float32, -bound2, bound2)
    return w1, b1, w2, b2


if __name__ == "__main__":
    key = jax.random.PRNGKey(0)
    kx, kp = jax.random.split(key)

    # X = torch.rand(2, 3) analogue: uniform [0, 1)
    x = jax.random.uniform(kx, (2, 3), jnp.float32)
    w1, b1, w2, b2 = init_params(kp)

    out = mlp_forward(x, w1, b1, w2, b2)
    out = jax.block_until_ready(out)

    # Pure-JAX reference check (same math as the PyTorch module).
    ref = jnp.maximum(x @ w1.T + b1, 0.0) @ w2.T + b2
    assert out.shape == (2, 1), out.shape
    assert jnp.allclose(out, ref, atol=1e-5), (out, ref)

    print("KERNEL_OK")
</pallas_src>

<mosaic_0001>
module attributes {stable_mosaic.version = 11 : i64} {
  func.func @mlp_kernel(%arg0: i32, %arg1: memref<2x3xf32, #tpu.memory_space<smem>>, %arg2: memref<2xf32, #tpu.memory_space<smem>>, %arg3: memref<1x2xf32, #tpu.memory_space<smem>>, %arg4: memref<1xf32, #tpu.memory_space<smem>>, %arg5: memref<3x1x128xf32, #tpu.memory_space<vmem>>, %arg6: memref<1x128xf32, #tpu.memory_space<vmem>>) attributes {dimension_semantics = [#tpu.dimension_semantics<parallel>], iteration_bounds = array<i64: 1>, scalar_prefetch = 0 : i64, scratch_operands = 0 : i64, tpu.core_type = #tpu.core_type<tc>, window_params = [{transform_indices = @transform_0, window_bounds = array<i64: 2, 3>}, {transform_indices = @transform_1, window_bounds = array<i64: 2>}, {transform_indices = @transform_2, window_bounds = array<i64: 1, 2>}, {transform_indices = @transform_3, window_bounds = array<i64: 1>}, {transform_indices = @transform_4, window_bounds = array<i64: 3, 1, 128>}, {transform_indices = @transform_5, window_bounds = array<i64: 1, 128>}]} {
    %c0 = arith.constant 0 : index
    %c0_0 = arith.constant 0 : index
    %c0_1 = arith.constant 0 : index
    %0 = vector.load %arg5[%c0, %c0_0, %c0_1] : memref<3x1x128xf32, #tpu.memory_space<vmem>>, vector<1x1x128xf32>
    %1 = vector.shape_cast %0 : vector<1x1x128xf32> to vector<1x128xf32>
    %c1 = arith.constant 1 : index
    %c0_2 = arith.constant 0 : index
    %c0_3 = arith.constant 0 : index
    %2 = vector.load %arg5[%c1, %c0_2, %c0_3] : memref<3x1x128xf32, #tpu.memory_space<vmem>>, vector<1x1x128xf32>
    %3 = vector.shape_cast %2 : vector<1x1x128xf32> to vector<1x128xf32>
    %c2 = arith.constant 2 : index
    %c0_4 = arith.constant 0 : index
    %c0_5 = arith.constant 0 : index
    %4 = vector.load %arg5[%c2, %c0_4, %c0_5] : memref<3x1x128xf32, #tpu.memory_space<vmem>>, vector<1x1x128xf32>
    %5 = vector.shape_cast %4 : vector<1x1x128xf32> to vector<1x128xf32>
    %c0_6 = arith.constant 0 : index
    %c0_7 = arith.constant 0 : index
    %6 = memref.load %arg1[%c0_6, %c0_7] : memref<2x3xf32, #tpu.memory_space<smem>>
    %7 = vector.broadcast %6 : f32 to vector<1x128xf32>
    %8 = arith.mulf %7, %1 : vector<1x128xf32>
    %c0_8 = arith.constant 0 : index
    %c1_9 = arith.constant 1 : index
    %9 = memref.load %arg1[%c0_8, %c1_9] : memref<2x3xf32, #tpu.memory_space<smem>>
    %10 = vector.broadcast %9 : f32 to vector<1x128xf32>
    %11 = arith.mulf %10, %3 : vector<1x128xf32>
    %12 = arith.addf %8, %11 : vector<1x128xf32>
    %c0_10 = arith.constant 0 : index
    %c2_11 = arith.constant 2 : index
    %13 = memref.load %arg1[%c0_10, %c2_11] : memref<2x3xf32, #tpu.memory_space<smem>>
    %14 = vector.broadcast %13 : f32 to vector<1x128xf32>
    %15 = arith.mulf %14, %5 : vector<1x128xf32>
    %16 = arith.addf %12, %15 : vector<1x128xf32>
    %c0_12 = arith.constant 0 : index
    %17 = memref.load %arg2[%c0_12] : memref<2xf32, #tpu.memory_space<smem>>
    %18 = vector.broadcast %17 : f32 to vector<1x128xf32>
    %19 = arith.addf %16, %18 : vector<1x128xf32>
    %cst = arith.constant 0.000000e+00 : f32
    %20 = vector.broadcast %cst : f32 to vector<1x128xf32>
    %21 = arith.maximumf %19, %20 : vector<1x128xf32>
    %c1_13 = arith.constant 1 : index
    %c0_14 = arith.constant 0 : index
    %22 = memref.load %arg1[%c1_13, %c0_14] : memref<2x3xf32, #tpu.memory_space<smem>>
    %23 = vector.broadcast %22 : f32 to vector<1x128xf32>
    %24 = arith.mulf %23, %1 : vector<1x128xf32>
    %c1_15 = arith.constant 1 : index
    %c1_16 = arith.constant 1 : index
    %25 = memref.load %arg1[%c1_15, %c1_16] : memref<2x3xf32, #tpu.memory_space<smem>>
    %26 = vector.broadcast %25 : f32 to vector<1x128xf32>
    %27 = arith.mulf %26, %3 : vector<1x128xf32>
    %28 = arith.addf %24, %27 : vector<1x128xf32>
    %c1_17 = arith.constant 1 : index
    %c2_18 = arith.constant 2 : index
    %29 = memref.load %arg1[%c1_17, %c2_18] : memref<2x3xf32, #tpu.memory_space<smem>>
    %30 = vector.broadcast %29 : f32 to vector<1x128xf32>
    %31 = arith.mulf %30, %5 : vector<1x128xf32>
    %32 = arith.addf %28, %31 : vector<1x128xf32>
    %c1_19 = arith.constant 1 : index
    %33 = memref.load %arg2[%c1_19] : memref<2xf32, #tpu.memory_space<smem>>
    %34 = vector.broadcast %33 : f32 to vector<1x128xf32>
    %35 = arith.addf %32, %34 : vector<1x128xf32>
    %cst_20 = arith.constant 0.000000e+00 : f32
    %36 = vector.broadcast %cst_20 : f32 to vector<1x128xf32>
    %37 = arith.maximumf %35, %36 : vector<1x128xf32>
    %c0_21 = arith.constant 0 : index
    %c0_22 = arith.constant 0 : index
    %38 = memref.load %arg3[%c0_21, %c0_22] : memref<1x2xf32, #tpu.memory_space<smem>>
    %39 = vector.broadcast %38 : f32 to vector<1x128xf32>
    %40 = arith.mulf %39, %21 : vector<1x128xf32>
    %c0_23 = arith.constant 0 : index
    %c1_24 = arith.constant 1 : index
    %41 = memref.load %arg3[%c0_23, %c1_24] : memref<1x2xf32, #tpu.memory_space<smem>>
    %42 = vector.broadcast %41 : f32 to vector<1x128xf32>
    %43 = arith.mulf %42, %37 : vector<1x128xf32>
    %44 = arith.addf %40, %43 : vector<1x128xf32>
    %c0_25 = arith.constant 0 : index
    %45 = memref.load %arg4[%c0_25] : memref<1xf32, #tpu.memory_space<smem>>
    %46 = vector.broadcast %45 : f32 to vector<1x128xf32>
    %47 = arith.addf %44, %46 : vector<1x128xf32>
    %c0_26 = arith.constant 0 : index
    %c0_27 = arith.constant 0 : index
    %48 = vector.load %arg6[%c0_26, %c0_27] : memref<1x128xf32, #tpu.memory_space<vmem>>, vector<1x128xf32>
    tpu.vector_store %arg6[%c0_26, %c0_27], %47 {strides = array<i32>} : memref<1x128xf32, #tpu.memory_space<vmem>>, vector<1x128xf32>,
    return
  }
  func.func @transform_0(%arg0: i32) -> (i32, i32) {
    %c0_i32 = arith.constant 0 : i32
    %c0_i32_0 = arith.constant 0 : i32
    %c0_i32_1 = arith.constant 0 : i32
    return %c0_i32, %c0_i32_0 : i32, i32
  }
  func.func @transform_1(%arg0: i32) -> i32 {
    %c0_i32 = arith.constant 0 : i32
    %c0_i32_0 = arith.constant 0 : i32
    return %c0_i32 : i32
  }
  func.func @transform_2(%arg0: i32) -> (i32, i32) {
    %c0_i32 = arith.constant 0 : i32
    %c0_i32_0 = arith.constant 0 : i32
    %c0_i32_1 = arith.constant 0 : i32
    return %c0_i32, %c0_i32_0 : i32, i32
  }
  func.func @transform_3(%arg0: i32) -> i32 {
    %c0_i32 = arith.constant 0 : i32
    %c0_i32_0 = arith.constant 0 : i32
    return %c0_i32 : i32
  }
  func.func @transform_4(%arg0: i32) -> (i32, i32, i32) {
    %c0_i32 = arith.constant 0 : i32
    %c0_i32_0 = arith.constant 0 : i32
    %c0_i32_1 = arith.constant 0 : i32
    return %c0_i32, %arg0, %c0_i32_0 : i32, i32, i32
  }
  func.func @transform_5(%arg0: i32) -> (i32, i32) {
    %c0_i32 = arith.constant 0 : i32
    %c0_i32_0 = arith.constant 0 : i32
    return %arg0, %c0_i32 : i32, i32
  }
}

</mosaic_0001>

<llo_original>
// kernel: tpu_custom_call.1
$region0: #{tpu_custom_call.1}
  #allocation0 [shape = 'u32[]', space=smem, size = 0x4, offset = 0x4, fixed_abs, tag = 'smem constant byte address 0x4 - core index']
  #allocation1 [shape = 'u32[144,128]{1,0:T(1,128)}', space=vmem, size = 0x12000, scoped, tag = 'internal scratch']
  #allocation2 [shape = 'f32[1]{0:T(128)S(6)}', space=smem, size = 0x200, scoped, tag = 'scoped memory for tpu_custom_call.1']
  %s0 = inlined_call_operand.vmem [shape: f32[2,3], index: 0, kind: input, shape index: {}]
  %s1 = inlined_call_operand.hbm [shape: f32[2], index: 1, kind: input, shape index: {}]
  %s2 = inlined_call_operand.hbm [shape: f32[1,2], index: 2, kind: input, shape index: {}]
  %s3 = inlined_call_operand.<no memory space> [shape: f32[1], index: 3, kind: input, shape index: {}]
  %s4 = inlined_call_operand.vmem [shape: f32[3,1,128], index: 4, kind: input, shape index: {}]
  %s5 = inlined_call_operand.hbm [shape: f32[1,128], index: 5, kind: output, shape index: {}]
  %s6 = sld [smem:[#allocation0]]
  $region42: #{tpu_custom_call.1} parent=0
    _
  %s8 = ssub.s32 1, %s6
  %s9 = scalar_select 0, %s8, %s6
  %10 = sst [smem:[#allocation2]] %s3
  $region1: #{tpu_custom_call.1} parent=0
    #allocation3 [shape = 'u8[1024]{0}', space=smem, size = 0x400, scoped, tag = 'input window, operand 0, single buffered']
    #allocation4 [shape = 's32[1]{0}', space=sflag, size = 0x4, scoped, tag = 'scoped memory for tpu_custom_call.1']
    #allocation5 [shape = 's32[1]{0}', space=sflag, size = 0x4, scoped, tag = 'scoped memory for tpu_custom_call.1']
    #allocation6 [shape = 's32[1]{0}', space=sflag, size = 0x4, scoped, tag = 'scoped memory for tpu_custom_call.1']
    #allocation7 [shape = 'u8[512]{0}', space=smem, size = 0x200, scoped, tag = 'input window, operand 1, single buffered']
    #allocation8 [shape = 'u8[512]{0}', space=smem, size = 0x200, scoped, tag = 'input window, operand 2, single buffered']
    #allocation9 [shape = 's32[1]{0}', space=sflag, size = 0x4, scoped, tag = 'scoped memory for tpu_custom_call.1']
    #allocation10 [shape = 'u8[512]{0}', space=vmem, size = 0x400, scoped, tag = 'output window, operand 0, single buffered']
    %11 = vsyncpa [#allocation6], 0
    %12 = vsyncpa [#allocation5], 0
    %13 = vsyncpa [#allocation9], 0
    %14 = vsyncpa [#allocation4], 0
    // Predicated region
    $region2: #{tpu_custom_call.1} parent=1 // pred_check
      _
    $region3: #{tpu_custom_call.1} parent=1 // pred_check_branch
      %16 = sbr.rel (0) target = $region5
    $region4: #{tpu_custom_call.1} parent=1 // pred_region
      %s18 = ssub.s32 32, 32
      %19 = vsyncadd [#allocation6], %s18
      %s21 = sshll.u32 %s0, 4
      %s22 = int_to_ptr.vmem [resolvable:$true] %s21
      %24 = dma.vmem_to_smem %s22, 32, [#allocation3], [#allocation6]
    $region5: #{tpu_custom_call.1} parent=1 // pred_fallthru
      _
    // Predicated region
    $region6: #{tpu_custom_call.1} parent=1 // pred_check
      _
    $region7: #{tpu_custom_call.1} parent=1 // pred_check_branch
      %26 = sbr.rel (0) target = $region9
    $region8: #{tpu_custom_call.1} parent=1 // pred_region
      %s28 = ssub.s32 16, 16
      %29 = vsyncadd [#allocation5], %s28
      %32 = dma.hbm_to_smem %s1, 16, [#allocation7], [#allocation5]
    $region9: #{tpu_custom_call.1} parent=1 // pred_fallthru
      _
    // Predicated region
    $region10: #{tpu_custom_call.1} parent=1 // pred_check
      _
    $region11: #{tpu_custom_call.1} parent=1 // pred_check_branch
      %34 = sbr.rel (0) target = $region13
    $region12: #{tpu_custom_call.1} parent=1 // pred_region
      %s36 = ssub.s32 16, 16
      %37 = vsyncadd [#allocation9], %s36
      %40 = dma.hbm_to_smem %s2, 16, [#allocation8], [#allocation9]
    $region13: #{tpu_custom_call.1} parent=1 // pred_fallthru
      _
    // Predicated region
    $region14: #{tpu_custom_call.1} parent=1 // pred_check
      _
    $region15: #{tpu_custom_call.1} parent=1 // pred_check_branch
      %42 = sbr.rel (0) target = $region17
    $region16: #{tpu_custom_call.1} parent=1 // pred_region
      _
    $region17: #{tpu_custom_call.1} parent=1 // pred_fallthru
      _
    // Predicated region
    $region18: #{tpu_custom_call.1} parent=1 // pred_check
      _
    $region19: #{tpu_custom_call.1} parent=1 // pred_check_branch
      %44 = sbr.rel (0) target = $region21
    $region20: #{tpu_custom_call.1} parent=1 // pred_region
      _
    $region21: #{tpu_custom_call.1} parent=1 // pred_fallthru
      _
    // Predicated region
    $region22: #{tpu_custom_call.1} parent=1 // pred_check
      _
    $region23: #{tpu_custom_call.1} parent=1 // pred_check_branch
      %46 = sbr.rel (0) target = $region25
    $region24: #{tpu_custom_call.1} parent=1 // pred_region
      %47 = dma.done [#allocation6], 32
    $region25: #{tpu_custom_call.1} parent=1 // pred_fallthru
      _
    // Predicated region
    $region26: #{tpu_custom_call.1} parent=1 // pred_check
      _
    $region27: #{tpu_custom_call.1} parent=1 // pred_check_branch
      %49 = sbr.rel (0) target = $region29
    $region28: #{tpu_custom_call.1} parent=1 // pred_region
      %50 = dma.done [#allocation5], 16
    $region29: #{tpu_custom_call.1} parent=1 // pred_fallthru
      _
    // Predicated region
    $region30: #{tpu_custom_call.1} parent=1 // pred_check
      _
    $region31: #{tpu_custom_call.1} parent=1 // pred_check_branch
      %52 = sbr.rel (0) target = $region33
    $region32: #{tpu_custom_call.1} parent=1 // pred_region
      %53 = dma.done [#allocation9], 16
    $region33: #{tpu_custom_call.1} parent=1 // pred_fallthru
      _
    %54 = sfence
    %v55 = vld [vmem:[%s4] sm:$0x1]
    %s56 = scalar_lea.vmem %s4, 1
    %v57 = vld [vmem:[%s56] sm:$0x1]
    %s58 = scalar_lea.vmem %s4, 2
    %v59 = vld [vmem:[%s58] sm:$0x1]
    %s60 = sld [smem:[#allocation3]]
    %v61 = vstv %s60
    %v62 = vmul.f32 %v61, %v55
    %s63 = sld [smem:[#allocation3 + $0x1]]
    %v64 = vstv %s63
    %v65 = vmul.f32 %v64, %v57
    %v66 = vadd.f32 %v62, %v65
    %s67 = sld [smem:[#allocation3 + $0x2]]
    %v68 = vstv %s67
    %v69 = vmul.f32 %v68, %v59
    %v70 = vadd.f32 %v66, %v69
    %s71 = sld [smem:[#allocation7]]
    %v72 = vstv %s71
    %v73 = vadd.f32 %v70, %v72
    %v74 = vmax.f32 %v73, 0.0
    %s75 = sld [smem:[#allocation3 + $0x80]]
    %v76 = vstv %s75
    %v77 = vmul.f32 %v76, %v55
    %s78 = sld [smem:[#allocation3 + $0x81]]
    %v79 = vstv %s78
    %v80 = vmul.f32 %v79, %v57
    %v81 = vadd.f32 %v77, %v80
    %s82 = sld [smem:[#allocation3 + $0x82]]
    %v83 = vstv %s82
    %v84 = vmul.f32 %v83, %v59
    %v85 = vadd.f32 %v81, %v84
    %s86 = sld [smem:[#allocation7 + $0x1]]
    %v87 = vstv %s86
    %v88 = vadd.f32 %v85, %v87
    %v89 = vmax.f32 %v88, 0.0
    %s90 = sld [smem:[#allocation8]]
    %v91 = vstv %s90
    %v92 = vmul.f32 %v91, %v74
    %s93 = sld [smem:[#allocation8 + $0x1]]
    %v94 = vstv %s93
    %v95 = vmul.f32 %v94, %v89
    %v96 = vadd.f32 %v92, %v95
    %s97 = sld [smem:[#allocation2]]
    %v98 = vstv %s97
    %v99 = vadd.f32 %v96, %v98
    %100 = vst [vmem:[#allocation10] sm:$0x1] %v99
    // Predicated region
    $region34: #{tpu_custom_call.1} parent=1 // pred_check
      _
    $region35: #{tpu_custom_call.1} parent=1 // pred_check_branch
      %102 = sbr.rel (0) target = $region37
    $region36: #{tpu_custom_call.1} parent=1 // pred_region
      %s104 = ssub.s32 16, 16
      %105 = vsyncadd [#allocation4], %s104
      %s107 = sshll.u32 [#allocation10], 4
      %s108 = int_to_ptr.vmem [resolvable:$true] %s107
      %110 = dma.vmem_to_hbm [thread:$0]  %s108, 16, %s5, [#allocation4]
    $region37: #{tpu_custom_call.1} parent=1 // pred_fallthru
      _
    // Predicated region
    $region38: #{tpu_custom_call.1} parent=1 // pred_check
      _
    $region39: #{tpu_custom_call.1} parent=1 // pred_check_branch
      %112 = sbr.rel (0) target = $region41
    $region40: #{tpu_custom_call.1} parent=1 // pred_region
      %113 = dma.done [#allocation4], 16
    $region41: #{tpu_custom_call.1} parent=1 // pred_fallthru
      _
    %114 = vsyncpa [#allocation4], 1
    %115 = vsyncpa [#allocation5], 1
    %116 = vsyncpa [#allocation9], 1
    %117 = vsyncpa [#allocation6], 1

</llo_original>
